<compile_context>
chip_gen: v6e
topology: v6e:2x2x1
jax: 0.10.0
libtpu: 0.0.40
codegen_flags: <defaults>
</compile_context>

<pallas_src>
import functools
import math

import jax
import jax.numpy as jnp
from jax.experimental import pallas as pl
from jax.experimental.pallas import tpu as pltpu


def _round_up(v, m):
    return (v + m - 1) // m * m


def _clamp_tiles(n, tm, tk):
    """Tile clamping shared by prepare_gcnii_graph and gcnii_layer."""
    n_base = _round_up(n, 128)
    tm = max(128, min(_round_up(tm, 128), n_base))
    tk = max(128, min(_round_up(tk, 128), n_base))
    # v7x megacore: keep at least 2 row tiles (grid[0] >= 2) so both
    # TensorCores get work when the graph is big enough.
    if n_base >= 256:
        tm = min(tm, _round_up(-(-n // 2), 128))
    return tm, tk


def _vmem_limit_bytes():
    """Generation-aware scoped-VMEM limit (~75% of physical, capped)."""
    default_cap = 64 * 1024 * 1024
    try:
        cap = getattr(pltpu.get_tpu_info(), "vmem_capacity_bytes", default_cap)
    except Exception:  # pragma: no cover - conservative fallback
        cap = default_cap
    return int(min(cap * 3 // 4, 100 * 1024 * 1024))


def prepare_gcnii_graph(adj, *, tm=512, tk=512, compute_dtype=jnp.bfloat16):
    """Pad + cast the dense normalized adjacency ONCE, outside the hot path.

    The result can be passed directly to gcnii_layer (with matching tm/tk and
    compute_dtype); the wrapper then does no per-call pad/cast of the N^2 array.
    """
    n = adj.shape[0]
    assert adj.shape == (n, n), "expected a square dense adjacency"
    tm, tk = _clamp_tiles(n, tm, tk)
    n_pad_m = _round_up(n, tm)
    n_pad_k = _round_up(n, tk)
    out = adj if adj.dtype == compute_dtype else adj.astype(compute_dtype)
    if out.shape != (n_pad_m, n_pad_k):
        out = jnp.pad(out, ((0, n_pad_m - n), (0, n_pad_k - n)))
    return out


def _gcnii_kernel(*refs, alpha, residual, x_resident, tm, tk):
    if x_resident:
        adj_ref, x_ref, init_ref, w_ref, o_ref, acc_ref = refs
        xres_ref = None
    else:
        if residual:
            adj_ref, x_ref, init_ref, xres_ref, w_ref, o_ref, acc_ref = refs
        else:
            adj_ref, x_ref, init_ref, w_ref, o_ref, acc_ref = refs
            xres_ref = None

    i = pl.program_id(0)
    k = pl.program_id(1)

    @pl.when(k == 0)
    def _init():
        acc_ref[...] = jnp.zeros_like(acc_ref)

    # Inner reduction: pure MXU accumulate of A[i-tile, k-tile] @ X[k-tile, :]
    # into the f32 VMEM accumulator.
    if x_resident:
        x_tile = x_ref[pl.ds(pl.multiple_of(k * tk, tk), tk), :]
    else:
        x_tile = x_ref[...]
    acc_ref[...] += jnp.dot(
        adj_ref[...], x_tile, preferred_element_type=jnp.float32
    )

    # Fused epilogue, once per output row tile (last reduction step only).
    # beta is already folded into W' = beta*W + (1-beta)*I by the wrapper.
    @pl.when(k == pl.num_programs(1) - 1)
    def _finalize():
        hidden = (1.0 - alpha) * acc_ref[...] + alpha * init_ref[...].astype(
            jnp.float32
        )
        h = jnp.dot(hidden, w_ref[...], preferred_element_type=jnp.float32)
        if residual:
            if x_resident:
                xres = x_ref[pl.ds(pl.multiple_of(i * tm, tm), tm), :]
            else:
                xres = xres_ref[...]
            h = h + xres.astype(jnp.float32)
        o_ref[...] = h.astype(o_ref.dtype)


def gcnii_layer(
    adj,
    x,
    init_x,
    weight,
    *,
    alpha=0.1,
    beta=1.0,
    residual=False,
    tm=512,
    tk=512,
    compute_dtype=jnp.bfloat16,
    x_resident_max_bytes=8 * 1024 * 1024,
):
    """Pallas GCNIILayer.forward.

    adj:    (N, N) dense symmetric-normalized adjacency, OR the output of
            prepare_gcnii_graph() (already padded + cast -> zero wrapper work).
    x:      (N, C) node features
    init_x: (N, C) initial node features
    weight: (C, C) layer weight
    tm/tk:  row-tile / reduction-tile sizes (multiples of 128)
    compute_dtype: dtype of the adjacency / feature stream of A@x (bf16 by
        default; accumulation and epilogue stay f32).  Use jnp.float32 for
        exact results.
    x_resident_max_bytes: keep X fully resident in VMEM (single DMA) when its
        padded compute-dtype footprint fits this budget; else stream per tile.
    """
    n, c = x.shape
    assert init_x.shape == (n, c)
    assert weight.shape == (c, c)
    out_dtype = x.dtype

    # ---- lane-dense channel padding (C -> multiple of 128) ----
    c_pad = _round_up(c, 128)

    # ---- tile sizes & per-axis N padding (no lcm over-padding) ----
    tm, tk = _clamp_tiles(n, tm, tk)
    n_pad_m = _round_up(n, tm)   # adjacency rows / init / residual / output
    n_pad_k = _round_up(n, tk)   # adjacency cols / x reduction rows

    # ---- adjacency: reuse pre-prepared array if possible (no HBM copy) ----
    ra, ca = adj.shape
    if ra == n_pad_m and ca == n_pad_k and adj.dtype == compute_dtype:
        adj_c = adj  # already prepared by prepare_gcnii_graph
    else:
        assert (ra, ca) == (n, n), (
            "adjacency must be (N, N) or pre-prepared with matching "
            "tm/tk/compute_dtype via prepare_gcnii_graph"
        )
        adj_c = adj if adj.dtype == compute_dtype else adj.astype(compute_dtype)
        if (ra, ca) != (n_pad_m, n_pad_k):
            adj_c = jnp.pad(adj_c, ((0, n_pad_m - n), (0, n_pad_k - n)))

    # ---- x: a single padded compute-dtype copy, reused for the reduction
    #      stream and (when residual) the residual add ----
    x_rows = max(n_pad_m, n_pad_k) if residual else n_pad_k
    x_c = x if x.dtype == compute_dtype else x.astype(compute_dtype)
    if x_c.shape != (x_rows, c_pad):
        x_c = jnp.pad(x_c, ((0, x_rows - n), (0, c_pad - c)))

    init_p = jnp.pad(init_x, ((0, n_pad_m - n), (0, c_pad - c)))

    # ---- fold beta into the weight: W' = beta*W + (1-beta)*I (padded) ----
    w_eff = beta * jnp.pad(
        weight.astype(jnp.float32), ((0, c_pad - c), (0, c_pad - c))
    ) + (1.0 - beta) * jnp.eye(c_pad, dtype=jnp.float32)

    # ---- keep X resident in VMEM when it is small enough ----
    cs = jnp.dtype(compute_dtype).itemsize
    x_resident = x_rows * c_pad * cs <= x_resident_max_bytes

    grid = (n_pad_m // tm, n_pad_k // tk)

    in_specs = [pl.BlockSpec((tm, tk), lambda i, k: (i, k))]       # adj tile
    args = [adj_c]
    if x_resident:
        # Full-height X, constant index_map -> DMA'd once, stays resident.
        in_specs.append(pl.BlockSpec((x_rows, c_pad), lambda i, k: (0, 0)))
    else:
        in_specs.append(pl.BlockSpec((tk, c_pad), lambda i, k: (k, 0)))
    args.append(x_c)
    in_specs.append(pl.BlockSpec((tm, c_pad), lambda i, k: (i, 0)))  # init_x
    args.append(init_p)
    if residual and not x_resident:
        in_specs.append(pl.BlockSpec((tm, c_pad), lambda i, k: (i, 0)))
        args.append(x_c)  # same buffer, different BlockSpec (row tiles)
    in_specs.append(pl.BlockSpec((c_pad, c_pad), lambda i, k: (0, 0)))  # W'
    args.append(w_eff)

    out_specs = pl.BlockSpec((tm, c_pad), lambda i, k: (i, 0))

    kernel = functools.partial(
        _gcnii_kernel,
        alpha=float(alpha),
        residual=bool(residual),
        x_resident=bool(x_resident),
        tm=tm,
        tk=tk,
    )

    # Advisory cost estimate (scheduler hint).
    flops = (
        2 * n_pad_m * n_pad_k * c_pad
        + 2 * n_pad_m * c_pad * c_pad
        + 4 * n_pad_m * c_pad
    )
    if x_resident:
        x_bytes = x_rows * c_pad * cs
    else:
        x_bytes = (n_pad_m // tm) * n_pad_k * c_pad * cs
        if residual:
            x_bytes += n_pad_m * c_pad * cs
    bytes_accessed = (
        n_pad_m * n_pad_k * cs                                    # adjacency
        + x_bytes                                                 # x stream(s)
        + n_pad_m * c_pad * jnp.dtype(init_p.dtype).itemsize      # init_x
        + c_pad * c_pad * 4                                       # W'
        + n_pad_m * c_pad * jnp.dtype(out_dtype).itemsize         # output
    )

    out_p = pl.pallas_call(
        kernel,
        out_shape=jax.ShapeDtypeStruct((n_pad_m, c_pad), out_dtype),
        grid=grid,
        in_specs=in_specs,
        out_specs=out_specs,
        scratch_shapes=[pltpu.VMEM((tm, c_pad), jnp.float32)],
        compiler_params=pltpu.CompilerParams(
            # rows shard across TensorCores; the A-reduction axis carries the
            # accumulator and must stay serial.
            dimension_semantics=("parallel", "arbitrary"),
            vmem_limit_bytes=_vmem_limit_bytes(),
        ),
        cost_estimate=pl.CostEstimate(
            flops=int(flops), transcendentals=0, bytes_accessed=int(bytes_accessed)
        ),
    )(*args)

    return out_p[:n, :c]


def _make_normalized_adj(key, n):
    """Deterministic dense symmetric-normalized adjacency with self loops."""
    a = (jax.random.uniform(key, (n, n)) < 0.1).astype(jnp.float32)
    a = jnp.maximum(a, a.T)                      # symmetrize
    a = a + jnp.eye(n, dtype=jnp.float32)        # self loops
    deg = jnp.sum(a, axis=1)
    d_inv_sqrt = 1.0 / jnp.sqrt(deg)
    return a * d_inv_sqrt[:, None] * d_inv_sqrt[None, :]


def _reference(adj, x, init_x, weight, alpha, beta, residual):
    hidden = adj @ x
    hidden = (1.0 - alpha) * hidden + alpha * init_x
    h = beta * (hidden @ weight) + (1.0 - beta) * hidden
    if residual:
        h = h + x
    return h


if __name__ == "__main__":
    n_nodes = 256
    n_channels = 32
    alpha = 0.1
    beta = 0.5
    residual = True

    key = jax.random.PRNGKey(0)
    k_adj, k_x, k_init, k_w = jax.random.split(key, 4)

    adj = _make_normalized_adj(k_adj, n_nodes)
    x = jax.random.normal(k_x, (n_nodes, n_channels), dtype=jnp.float32)
    init_x = jax.random.normal(k_init, (n_nodes, n_channels), dtype=jnp.float32)

    # nn.Parameter(n_channels, n_channels) init: uniform(-stdv, stdv), stdv=1/sqrt(C)
    stdv = 1.0 / math.sqrt(n_channels)
    weight = jax.random.uniform(
        k_w, (n_channels, n_channels), minval=-stdv, maxval=stdv, dtype=jnp.float32
    )

    ref = _reference(adj, x, init_x, weight, alpha, beta, residual)

    # 1) Exact f32 path, 2x2 tiled grid (init / accumulate / fused finalize),
    #    resident X.
    out_f32 = gcnii_layer(
        adj, x, init_x, weight,
        alpha=alpha, beta=beta, residual=residual,
        tm=128, tk=128, compute_dtype=jnp.float32,
    )
    out_f32 = jax.block_until_ready(out_f32)
    assert out_f32.shape == (n_nodes, n_channels)
    assert jnp.allclose(out_f32, ref, atol=1e-4, rtol=1e-4), "f32 mismatch vs reference"

    # 2) Default bf16 adjacency/feature stream with a PRE-PREPARED adjacency
    #    (no per-call pad/cast of the N^2 array); f32 accumulation + epilogue.
    adj_prep = prepare_gcnii_graph(adj)  # default tm/tk/compute_dtype match the call
    out_bf16 = gcnii_layer(
        adj_prep, x, init_x, weight,
        alpha=alpha, beta=beta, residual=residual,
    )
    out_bf16 = jax.block_until_ready(out_bf16)
    assert jnp.allclose(out_bf16, ref, atol=5e-2, rtol=5e-2), "bf16 mismatch vs reference"

    # 3) Forced streamed-X path (coverage of the non-resident BlockSpec route).
    out_stream = gcnii_layer(
        adj, x, init_x, weight,
        alpha=alpha, beta=beta, residual=residual,
        tm=128, tk=128, compute_dtype=jnp.float32, x_resident_max_bytes=0,
    )
    out_stream = jax.block_until_ready(out_stream)
    assert jnp.allclose(out_stream, ref, atol=1e-4, rtol=1e-4), "streamed-X mismatch"

    print("KERNEL_OK")
</pallas_src>

<mosaic_0001>
module attributes {stable_mosaic.version = 11 : i64} {
  func.func @_gcnii_kernel(%arg0: i32, %arg1: i32, %arg2: memref<128x128xf32, #tpu.memory_space<vmem>>, %arg3: memref<256x128xf32, #tpu.memory_space<vmem>>, %arg4: memref<128x128xf32, #tpu.memory_space<vmem>>, %arg5: memref<128x128xf32, #tpu.memory_space<vmem>>, %arg6: memref<128x128xf32, #tpu.memory_space<vmem>>, %arg7: memref<128x128xf32, #tpu.memory_space<vmem>>) attributes {dimension_semantics = [#tpu.dimension_semantics<parallel>, #tpu.dimension_semantics<arbitrary>], iteration_bounds = array<i64: 2, 2>, scalar_prefetch = 0 : i64, scratch_operands = 1 : i64, tpu.core_type = #tpu.core_type<tc>, window_params = [{transform_indices = @transform_0, window_bounds = array<i64: 128, 128>}, {pipeline_mode = #tpu.pipeline_mode<synchronous>, transform_indices = @transform_1, window_bounds = array<i64: 256, 128>}, {transform_indices = @transform_2, window_bounds = array<i64: 128, 128>}, {pipeline_mode = #tpu.pipeline_mode<synchronous>, transform_indices = @transform_3, window_bounds = array<i64: 128, 128>}, {transform_indices = @transform_4, window_bounds = array<i64: 128, 128>}]} {
    %c0_i32 = arith.constant 0 : i32
    %0 = arith.cmpi eq, %arg1, %c0_i32 : i32
    %1 = arith.extui %0 : i1 to i32
    %c0_i32_0 = arith.constant 0 : i32
    %2 = arith.cmpi ne, %1, %c0_i32_0 : i32
    scf.if %2 {
      %cst_8 = arith.constant 0.000000e+00 : f32
      %15 = vector.broadcast %cst_8 : f32 to vector<128x128xf32>
      %c0_9 = arith.constant 0 : index
      %c0_10 = arith.constant 0 : index
      %16 = vector.load %arg7[%c0_9, %c0_10] : memref<128x128xf32, #tpu.memory_space<vmem>>, vector<128x128xf32>
      tpu.vector_store %arg7[%c0_9, %c0_10], %15 {strides = array<i32>} : memref<128x128xf32, #tpu.memory_space<vmem>>, vector<128x128xf32>,
    } else {
    }
    %c128_i32 = arith.constant 128 : i32
    %3 = arith.muli %arg1, %c128_i32 : i32
    %4 = tpu.assume_multiple %3, 128 : i32
    %5 = arith.index_cast %4 : i32 to index
    %c0 = arith.constant 0 : index
    %6 = vector.load %arg3[%5, %c0] : memref<256x128xf32, #tpu.memory_space<vmem>>, vector<128x128xf32>
    %c0_1 = arith.constant 0 : index
    %c0_2 = arith.constant 0 : index
    %7 = vector.load %arg7[%c0_1, %c0_2] : memref<128x128xf32, #tpu.memory_space<vmem>>, vector<128x128xf32>
    %c0_3 = arith.constant 0 : index
    %c0_4 = arith.constant 0 : index
    %8 = vector.load %arg2[%c0_3, %c0_4] : memref<128x128xf32, #tpu.memory_space<vmem>>, vector<128x128xf32>
    %cst = arith.constant dense<0.000000e+00> : vector<128x128xf32>
    %9 = tpu.matmul %8, %6, %cst {dimension_numbers = #tpu.dot_dimension_numbers<[1], [0], [0], [1], [0, 0, 1, 1], [], []>} : vector<128x128xf32>, vector<128x128xf32>, vector<128x128xf32> -> vector<128x128xf32>
    %10 = arith.addf %7, %9 : vector<128x128xf32>
    %c0_5 = arith.constant 0 : index
    %c0_6 = arith.constant 0 : index
    %11 = vector.load %arg7[%c0_5, %c0_6] : memref<128x128xf32, #tpu.memory_space<vmem>>, vector<128x128xf32>
    tpu.vector_store %arg7[%c0_5, %c0_6], %10 {strides = array<i32>} : memref<128x128xf32, #tpu.memory_space<vmem>>, vector<128x128xf32>,
    %c1_i32 = arith.constant 1 : i32
    %12 = arith.cmpi eq, %arg1, %c1_i32 : i32
    %13 = arith.extui %12 : i1 to i32
    %c0_i32_7 = arith.constant 0 : i32
    %14 = arith.cmpi ne, %13, %c0_i32_7 : i32
    scf.if %14 {
      %c0_8 = arith.constant 0 : index
      %c0_9 = arith.constant 0 : index
      %15 = vector.load %arg7[%c0_8, %c0_9] : memref<128x128xf32, #tpu.memory_space<vmem>>, vector<128x128xf32>
      %cst_10 = arith.constant 0.899999976 : f32
      %16 = vector.broadcast %cst_10 : f32 to vector<128x128xf32>
      %17 = arith.mulf %16, %15 : vector<128x128xf32>
      %c0_11 = arith.constant 0 : index
      %c0_12 = arith.constant 0 : index
      %18 = vector.load %arg4[%c0_11, %c0_12] : memref<128x128xf32, #tpu.memory_space<vmem>>, vector<128x128xf32>
      %cst_13 = arith.constant 1.000000e-01 : f32
      %19 = vector.broadcast %cst_13 : f32 to vector<128x128xf32>
      %20 = arith.mulf %19, %18 : vector<128x128xf32>
      %21 = arith.addf %17, %20 : vector<128x128xf32>
      %c0_14 = arith.constant 0 : index
      %c0_15 = arith.constant 0 : index
      %22 = vector.load %arg5[%c0_14, %c0_15] : memref<128x128xf32, #tpu.memory_space<vmem>>, vector<128x128xf32>
      %cst_16 = arith.constant dense<0.000000e+00> : vector<128x128xf32>
      %23 = tpu.matmul %21, %22, %cst_16 {dimension_numbers = #tpu.dot_dimension_numbers<[1], [0], [0], [1], [0, 0, 1, 1], [], []>} : vector<128x128xf32>, vector<128x128xf32>, vector<128x128xf32> -> vector<128x128xf32>
      %c128_i32_17 = arith.constant 128 : i32
      %24 = arith.muli %arg0, %c128_i32_17 : i32
      %25 = tpu.assume_multiple %24, 128 : i32
      %26 = arith.index_cast %25 : i32 to index
      %c0_18 = arith.constant 0 : index
      %27 = vector.load %arg3[%26, %c0_18] : memref<256x128xf32, #tpu.memory_space<vmem>>, vector<128x128xf32>
      %28 = arith.addf %23, %27 : vector<128x128xf32>
      %c0_19 = arith.constant 0 : index
      %c0_20 = arith.constant 0 : index
      %29 = vector.load %arg6[%c0_19, %c0_20] : memref<128x128xf32, #tpu.memory_space<vmem>>, vector<128x128xf32>
      tpu.vector_store %arg6[%c0_19, %c0_20], %28 {strides = array<i32>} : memref<128x128xf32, #tpu.memory_space<vmem>>, vector<128x128xf32>,
    } else {
    }
    return
  }
  func.func @transform_0(%arg0: i32, %arg1: i32) -> (i32, i32) {
    %c0_i32 = arith.constant 0 : i32
    return %arg0, %arg1 : i32, i32
  }
  func.func @transform_1(%arg0: i32, %arg1: i32) -> (i32, i32) {
    %c0_i32 = arith.constant 0 : i32
    %c0_i32_0 = arith.constant 0 : i32
    %c0_i32_1 = arith.constant 0 : i32
    return %c0_i32, %c0_i32_0 : i32, i32
  }
  func.func @transform_2(%arg0: i32, %arg1: i32) -> (i32, i32) {
    %c0_i32 = arith.constant 0 : i32
    %c0_i32_0 = arith.constant 0 : i32
    return %arg0, %c0_i32 : i32, i32
  }
  func.func @transform_3(%arg0: i32, %arg1: i32) -> (i32, i32) {
    %c0_i32 = arith.constant 0 : i32
    %c0_i32_0 = arith.constant 0 : i32
    %c0_i32_1 = arith.constant 0 : i32
    return %c0_i32, %c0_i32_0 : i32, i32
  }
  func.func @transform_4(%arg0: i32, %arg1: i32) -> (i32, i32) {
    %c0_i32 = arith.constant 0 : i32
    %c0_i32_0 = arith.constant 0 : i32
    return %arg0, %c0_i32 : i32, i32
  }
}

</mosaic_0001>

<llo_original>
// kernel: tpu_custom_call.1
$region0: #{tpu_custom_call.1}
  #allocation0 [shape = 'u32[]', space=smem, size = 0x4, offset = 0x4, fixed_abs, tag = 'smem constant byte address 0x4 - core index']
  #allocation1 [shape = 'u32[144,128]{1,0:T(1,128)}', space=vmem, size = 0x12000, scoped, tag = 'internal scratch']
  #allocation2 [shape = 'f32[128,128]{1,0:T(8,128)}', space=vmem, size = 0x10000, scoped, tag = 'scratch operand']
  %s0 = inlined_call_operand.hbm [shape: f32[256,256], index: 0, kind: input, shape index: {}]
  %s1 = inlined_call_operand.hbm [shape: f32[256,128], index: 1, kind: input, shape index: {}]
  %s2 = inlined_call_operand.hbm [shape: f32[256,128], index: 2, kind: input, shape index: {}]
  %s3 = inlined_call_operand.hbm [shape: f32[128,128], index: 3, kind: input, shape index: {}]
  %s4 = inlined_call_operand.hbm [shape: f32[256,128], index: 4, kind: output, shape index: {}]
  %s5 = sld [smem:[#allocation0]]
  $region73: #{tpu_custom_call.1} parent=0
    _
  %s7 = ssub.s32 1, %s5
  %s8 = scalar_select 0, %s7, %s5
  $region1: #{tpu_custom_call.1} parent=0
    #allocation3 [shape = 'u8[131072]{0}', space=vmem, size = 0x20000, scoped, tag = 'input window, operand 0']
    #allocation4 [shape = 's32[2]{0}', space=sflag, size = 0x8, scoped, tag = 'scoped memory for tpu_custom_call.1']
    #allocation5 [shape = 's32[2]{0}', space=sflag, size = 0x8, scoped, tag = 'scoped memory for tpu_custom_call.1']
    #allocation6 [shape = 'u8[131072]{0}', space=vmem, size = 0x20000, scoped, tag = 'input window, operand 1, single buffered']
    #allocation7 [shape = 's32[1]{0}', space=sflag, size = 0x4, scoped, tag = 'scoped memory for tpu_custom_call.1']
    #allocation8 [shape = 'u8[131072]{0}', space=vmem, size = 0x20000, scoped, tag = 'input window, operand 2']
    #allocation9 [shape = 'u8[65536]{0}', space=vmem, size = 0x10000, scoped, tag = 'input window, operand 3, single buffered']
    #allocation10 [shape = 'u8[131072]{0}', space=vmem, size = 0x20000, scoped, tag = 'output window, operand 0']
    %9 = vsyncpa [#allocation4], 0
    %s10 = scalar_lea.sflag [#allocation4], 1
    %11 = vsyncpa %s10, 0
    %12 = vsyncpa [#allocation7], 0
    %13 = vsyncpa [#allocation5], 0
    %s14 = scalar_lea.sflag [#allocation5], 1
    %15 = vsyncpa %s14, 0
    loop: start=0, step=1, limit=6
    $region2: #{tpu_custom_call.1} parent=1 // loop_pre_header
      _
    $region3: #{tpu_custom_call.1} parent=1 // loop_header
      %s17 = sphi 0, %s21
      %p18 = scmp.ge.s32.totalorder %s17, 6
      %s24 = sphi 0, %s36
      %s25 = sphi 0, %s32
      %s26 = sphi 0, %s24
      %s27 = sphi 0, %s25
      %s28 = sphi 0, %s26
      %s29 = sphi 0, %s27
      %s41 = sphi 0, %s43
      %s44 = sphi 0, %s41
      %s45 = sphi 0, %s44
      %s61 = sphi 0, %s45
      %s65 = sphi 0, %s65
      %s67 = sphi 0, %s65
      %s68 = sphi 0, %s67
      %s82 = sphi 0, %s68
      %s88 = sphi 0, %s90
      %s91 = sphi 0, %s88
      %s92 = sphi 0, %s91
      %s108 = sphi 0, %s92
      %s112 = sphi 0, %s112
      %s114 = sphi 0, %s112
      %s115 = sphi 0, %s114
      %s129 = sphi 0, %s115
      %s135 = sphi 0, %s137
      %s138 = sphi 0, %s135
      %s139 = sphi 0, %s138
      %s155 = sphi 0, %s139
    $region4: #{tpu_custom_call.1} parent=1 // loop_header_branch
      %20 = sbr.rel (%p18) target = $region8
    $region5: #{tpu_custom_call.1} parent=1 // loop_body
      %s22 = ssub.s32 %s17, 1
      %s23 = ssub.s32 %s17, 2
      %s30 = sadd.s32 1, %s25
      %p31 = scmp.ge.s32.totalorder %s30, 2
      %s32 = scalar_select %p31, 0, %s30
      %s33 = sadd.s32 1, %s24
      %s34 = scalar_select %p31, %s33, %s24
      %p35 = scmp.ge.s32.totalorder %s34, 2
      %s36 = scalar_select %p35, 0, %s34
      %s37 = ssub.s32 %s24, %s36
      %s38 = ssub.s32 %s25, %s32
      %s39 = sor.u32 %s37, %s38
      %p40 = scmp.eq.s32.totalorder %s39, 0
      %s42 = sadd.s32 %s41, 1
      %s43 = scalar_select %p40, %s41, %s42
      %p46 = pneg %p40
      %p47 = scmp.eq.s32.totalorder %s17, 3
      %p48 = por %p46, %p47
      %p49 = scmp.ne.s32.totalorder %s41, %s44
      %p50 = scmp.eq.s32.totalorder %s17, 0
      %p51 = por %p49, %p50
      %p52 = scmp.ne.s32.totalorder %s41, %s44
      %p53 = scmp.eq.s32.totalorder %s22, 3
      %p54 = por %p52, %p53
      %p55 = scmp.ne.s32.totalorder %s44, %s45
      %p56 = scmp.eq.s32.totalorder %s22, 0
      %p57 = por %p55, %p56
      %p58 = scmp.ne.s32.totalorder %s44, %s45
      %p59 = scmp.eq.s32.totalorder %s23, 3
      %p60 = por %p58, %p59
      %p62 = scmp.ne.s32.totalorder %s45, %s61
      %p63 = scmp.eq.s32.totalorder %s23, 0
      %p64 = por %p62, %p63
      %s66 = sadd.s32 %s65, 1
      %p69 = scmp.eq.s32.totalorder %s17, 3
      %p70 = scmp.ne.s32.totalorder %s65, %s67
      %p71 = scmp.eq.s32.totalorder %s17, 0
      %p72 = por %p70, %p71
      %p73 = scmp.ne.s32.totalorder %s65, %s67
      %p74 = scmp.eq.s32.totalorder %s22, 3
      %p75 = por %p73, %p74
      %p76 = scmp.ne.s32.totalorder %s67, %s68
      %p77 = scmp.eq.s32.totalorder %s22, 0
      %p78 = por %p76, %p77
      %p79 = scmp.ne.s32.totalorder %s67, %s68
      %p80 = scmp.eq.s32.totalorder %s23, 3
      %p81 = por %p79, %p80
      %p83 = scmp.ne.s32.totalorder %s68, %s82
      %p84 = scmp.eq.s32.totalorder %s23, 0
      %p85 = por %p83, %p84
      %s86 = ssub.s32 %s24, %s36
      %p87 = scmp.eq.s32.totalorder %s86, 0
      %s89 = sadd.s32 %s88, 1
      %s90 = scalar_select %p87, %s88, %s89
      %p93 = pneg %p87
      %p94 = scmp.eq.s32.totalorder %s17, 3
      %p95 = por %p93, %p94
      %p96 = scmp.ne.s32.totalorder %s88, %s91
      %p97 = scmp.eq.s32.totalorder %s17, 0
      %p98 = por %p96, %p97
      %p99 = scmp.ne.s32.totalorder %s88, %s91
      %p100 = scmp.eq.s32.totalorder %s22, 3
      %p101 = por %p99, %p100
      %p102 = scmp.ne.s32.totalorder %s91, %s92
      %p103 = scmp.eq.s32.totalorder %s22, 0
      %p104 = por %p102, %p103
      %p105 = scmp.ne.s32.totalorder %s91, %s92
      %p106 = scmp.eq.s32.totalorder %s23, 3
      %p107 = por %p105, %p106
      %p109 = scmp.ne.s32.totalorder %s92, %s108
      %p110 = scmp.eq.s32.totalorder %s23, 0
      %p111 = por %p109, %p110
      %s113 = sadd.s32 %s112, 1
      %p116 = scmp.eq.s32.totalorder %s17, 3
      %p117 = scmp.ne.s32.totalorder %s112, %s114
      %p118 = scmp.eq.s32.totalorder %s17, 0
      %p119 = por %p117, %p118
      %p120 = scmp.ne.s32.totalorder %s112, %s114
      %p121 = scmp.eq.s32.totalorder %s22, 3
      %p122 = por %p120, %p121
      %p123 = scmp.ne.s32.totalorder %s114, %s115
      %p124 = scmp.eq.s32.totalorder %s22, 0
      %p125 = por %p123, %p124
      %p126 = scmp.ne.s32.totalorder %s114, %s115
      %p127 = scmp.eq.s32.totalorder %s23, 3
      %p128 = por %p126, %p127
      %p130 = scmp.ne.s32.totalorder %s115, %s129
      %p131 = scmp.eq.s32.totalorder %s23, 0
      %p132 = por %p130, %p131
      %s133 = ssub.s32 %s24, %s36
      %p134 = scmp.eq.s32.totalorder %s133, 0
      %s136 = sadd.s32 %s135, 1
      %s137 = scalar_select %p134, %s135, %s136
      %p140 = pneg %p134
      %p141 = scmp.eq.s32.totalorder %s17, 3
      %p142 = por %p140, %p141
      %p143 = scmp.ne.s32.totalorder %s135, %s138
      %p144 = scmp.eq.s32.totalorder %s17, 0
      %p145 = por %p143, %p144
      %p146 = scmp.ne.s32.totalorder %s135, %s138
      %p147 = scmp.eq.s32.totalorder %s22, 3
      %p148 = por %p146, %p147
      %p149 = scmp.ne.s32.totalorder %s138, %s139
      %p150 = scmp.eq.s32.totalorder %s22, 0
      %p151 = por %p149, %p150
      %p152 = scmp.ne.s32.totalorder %s138, %s139
      %p153 = scmp.eq.s32.totalorder %s23, 3
      %p154 = por %p152, %p153
      %p156 = scmp.ne.s32.totalorder %s139, %s155
      %p157 = scmp.eq.s32.totalorder %s23, 0
      %p158 = por %p156, %p157
      %p159 = scmp.le.s32.totalorder 1, %s17
      %p160 = scmp.lt.s32.totalorder %s17, 5
      %p161 = pnand %p159, %p160
      %p162 = pneg %p161
      // Predicated region
      $region9: #{tpu_custom_call.1} parent=5 // pred_check
        _
      $region10: #{tpu_custom_call.1} parent=5 // pred_check_branch
        %164 = sbr.rel (%p161) target = $region12
      $region11: #{tpu_custom_call.1} parent=5 // pred_region
        %s165 = ssub.s32 %s17, 1
        // Predicated region
        $region13: #{tpu_custom_call.1} parent=11 // pred_check
          %p166 = pneg %p78
        $region14: #{tpu_custom_call.1} parent=11 // pred_check_branch
          %168 = sbr.rel (%p166) target = $region16
        $region15: #{tpu_custom_call.1} parent=11 // pred_region
          %s170 = ssub.s32 4096, 4096
          %171 = vsyncadd [#allocation7], %s170
          %s172 = sshll.u32 [#allocation6], 4
          %s173 = int_to_ptr.vmem [resolvable:$true] %s172
          %178 = dma.hbm_to_vmem [thread:$0]  %s1, 4096, %s173, [#allocation7], 128, 128, 8
        $region16: #{tpu_custom_call.1} parent=11 // pred_fallthru
          _
        // Predicated region
        $region17: #{tpu_custom_call.1} parent=11 // pred_check
          %p179 = pneg %p125
        $region18: #{tpu_custom_call.1} parent=11 // pred_check_branch
          %181 = sbr.rel (%p179) target = $region20
        $region19: #{tpu_custom_call.1} parent=11 // pred_region
          %s183 = ssub.s32 2048, 2048
          %184 = vsyncadd [#allocation7], %s183
          %s185 = sshll.u32 [#allocation9], 4
          %s186 = int_to_ptr.vmem [resolvable:$true] %s185
          %191 = dma.hbm_to_vmem [thread:$0]  %s3, 2048, %s186, [#allocation7], 128, 128, 8
        $region20: #{tpu_custom_call.1} parent=11 // pred_fallthru
          _
      $region12: #{tpu_custom_call.1} parent=5 // pred_fallthru
        _
      %p192 = scmp.lt.s32.totalorder %s17, 4
      // Predicated region
      $region21: #{tpu_custom_call.1} parent=5 // pred_check
        %p193 = pneg %p192
      $region22: #{tpu_custom_call.1} parent=5 // pred_check_branch
        %195 = sbr.rel (%p193) target = $region24
      $region23: #{tpu_custom_call.1} parent=5 // pred_region
        // Predicated region
        $region25: #{tpu_custom_call.1} parent=23 // pred_check
          %p196 = pneg %p51
        $region26: #{tpu_custom_call.1} parent=23 // pred_check_branch
          %198 = sbr.rel (%p196) target = $region28
        $region27: #{tpu_custom_call.1} parent=23 // pred_region
          %s199 = sand.u32 %s17, 1
          %s200 = scalar_lea.sflag [#allocation4], %s199
          %s201 = sand.u32 %s41, 1
          %s202 = smul.addr %s201, 128
          %s203 = scalar_lea.vmem [#allocation3], %s202
          %s204 = smul.u32 16, %s24
          %s206 = ssub.s32 2048, 2048
          %207 = vsyncadd %s200, %s206
          %s208 = smul.addr %s204, 2
          %s209 = sadd.s32 %s25, %s208
          %s210 = smul.addr %s209, 128
          %s211 = scalar_lea.hbm %s0, %s210
          %s212 = sshll.u32 %s203, 4
          %s213 = int_to_ptr.vmem [resolvable:$true] %s212
          %218 = dma.hbm_to_vmem [thread:$0]  %s211, 2048, %s213, %s200, 256, 128, 8
        $region28: #{tpu_custom_call.1} parent=23 // pred_fallthru
          _
        // Predicated region
        $region29: #{tpu_custom_call.1} parent=23 // pred_check
          %p219 = pneg %p98
        $region30: #{tpu_custom_call.1} parent=23 // pred_check_branch
          %221 = sbr.rel (%p219) target = $region32
        $region31: #{tpu_custom_call.1} parent=23 // pred_region
          %s222 = sand.u32 %s17, 1
          %s223 = scalar_lea.sflag [#allocation4], %s222
          %s224 = sand.u32 %s88, 1
          %s225 = smul.addr %s224, 128
          %s226 = scalar_lea.vmem [#allocation8], %s225
          %s227 = smul.u32 16, %s24
          %s229 = ssub.s32 2048, 2048
          %230 = vsyncadd %s223, %s229
          %s231 = smul.addr %s227, 128
          %s232 = scalar_lea.hbm %s2, %s231
          %s233 = sshll.u32 %s226, 4
          %s234 = int_to_ptr.vmem [resolvable:$true] %s233
          %239 = dma.hbm_to_vmem [thread:$0]  %s232, 2048, %s234, %s223, 128, 128, 8
        $region32: #{tpu_custom_call.1} parent=23 // pred_fallthru
          _
      $region24: #{tpu_custom_call.1} parent=5 // pred_fallthru
        _
      %p240 = scmp.le.s32.totalorder 1, %s17
      %p241 = scmp.lt.s32.totalorder %s17, 5
      %p242 = pnand %p240, %p241
      %p243 = pneg %p242
      // Predicated region
      $region33: #{tpu_custom_call.1} parent=5 // pred_check
        _
      $region34: #{tpu_custom_call.1} parent=5 // pred_check_branch
        %245 = sbr.rel (%p242) target = $region36
      $region35: #{tpu_custom_call.1} parent=5 // pred_region
        %s246 = ssub.s32 %s17, 1
        %s247 = sand.u32 %s22, 1
        %s248 = scalar_lea.sflag [#allocation4], %s247
        %s249 = sand.u32 %s44, 1
        %s250 = smul.addr %s249, 128
        %s251 = scalar_lea.vmem [#allocation3], %s250
        // Predicated region
        $region37: #{tpu_custom_call.1} parent=35 // pred_check
          %p252 = pneg %p57
        $region38: #{tpu_custom_call.1} parent=35 // pred_check_branch
          %254 = sbr.rel (%p252) target = $region40
        $region39: #{tpu_custom_call.1} parent=35 // pred_region
          %255 = dma.done %s248, 2048
        $region40: #{tpu_custom_call.1} parent=35 // pred_fallthru
          _
        // Predicated region
        $region41: #{tpu_custom_call.1} parent=35 // pred_check
          %p256 = pneg %p78
        $region42: #{tpu_custom_call.1} parent=35 // pred_check_branch
          %258 = sbr.rel (%p256) target = $region44
        $region43: #{tpu_custom_call.1} parent=35 // pred_region
          %259 = dma.done [#allocation7], 4096
        $region44: #{tpu_custom_call.1} parent=35 // pred_fallthru
          _
        %s260 = sand.u32 %s22, 1
        %s261 = scalar_lea.sflag [#allocation4], %s260
        %s262 = sand.u32 %s91, 1
        %s263 = smul.addr %s262, 128
        %s264 = scalar_lea.vmem [#allocation8], %s263
        // Predicated region
        $region45: #{tpu_custom_call.1} parent=35 // pred_check
          %p265 = pneg %p104
        $region46: #{tpu_custom_call.1} parent=35 // pred_check_branch
          %267 = sbr.rel (%p265) target = $region48
        $region47: #{tpu_custom_call.1} parent=35 // pred_region
          %268 = dma.done %s261, 2048
        $region48: #{tpu_custom_call.1} parent=35 // pred_fallthru
          _
        // Predicated region
        $region49: #{tpu_custom_call.1} parent=35 // pred_check
          %p269 = pneg %p125
        $region50: #{tpu_custom_call.1} parent=35 // pred_check_branch
          %271 = sbr.rel (%p269) target = $region52
        $region51: #{tpu_custom_call.1} parent=35 // pred_region
          %272 = dma.done [#allocation7], 2048
        $region52: #{tpu_custom_call.1} parent=35 // pred_fallthru
          _
        %s273 = sand.u32 %s22, 1
        %s274 = scalar_lea.sflag [#allocation4], %s273
        %s275 = sand.u32 %s44, 1
        %s276 = smul.addr %s275, 128
        %s277 = scalar_lea.vmem [#allocation3], %s276
        %p278 = pneg %p57
        %p279 = pneg %p54
        %p280 = pneg %p78
        %p281 = pneg %p75
        %s282 = sand.u32 %s22, 1
        %s283 = scalar_lea.sflag [#allocation4], %s282
        %s284 = sand.u32 %s91, 1
        %s285 = smul.addr %s284, 128
        %s286 = scalar_lea.vmem [#allocation8], %s285
        %p287 = pneg %p104
        %p288 = pneg %p101
        %p289 = pneg %p125
        %p290 = pneg %p122
        %p291 = pneg %p151
        %p292 = pneg %p148
        %s293 = sand.u32 %s138, 1
        %s294 = scalar_lea.sflag [#allocation5], %s293
        %s295 = sand.u32 %s138, 1
        %s296 = smul.addr %s295, 128
        %s297 = scalar_lea.vmem [#allocation10], %s296
        %s298 = smul.u32 16, %s26
        %s299 = smul.u32 16, %s26
        %s300 = smul.u32 16, %s26
        %p301 = scmp.eq.s32.totalorder %s27, 0
        // Predicated region
        $region53: #{tpu_custom_call.1} parent=35 // pred_check
          %p302 = pneg %p301
        $region54: #{tpu_custom_call.1} parent=35 // pred_check_branch
          %304 = sbr.rel (%p302) target = $region56
        $region55: #{tpu_custom_call.1} parent=35 // pred_region
          %305 = vst [vmem:[#allocation2] sm:$0xff] 0.0
          %306 = vst [vmem:[#allocation2 + $0x8] sm:$0xff] 0.0
          %307 = vst [vmem:[#allocation2 + $0x10] sm:$0xff] 0.0
          %308 = vst [vmem:[#allocation2 + $0x18] sm:$0xff] 0.0
          %309 = vst [vmem:[#allocation2 + $0x20] sm:$0xff] 0.0
          %310 = vst [vmem:[#allocation2 + $0x28] sm:$0xff] 0.0
          %311 = vst [vmem:[#allocation2 + $0x30] sm:$0xff] 0.0
          %312 = vst [vmem:[#allocation2 + $0x38] sm:$0xff] 0.0
          %313 = vst [vmem:[#allocation2 + $0x40] sm:$0xff] 0.0
          %314 = vst [vmem:[#allocation2 + $0x48] sm:$0xff] 0.0
          %315 = vst [vmem:[#allocation2 + $0x50] sm:$0xff] 0.0
          %316 = vst [vmem:[#allocation2 + $0x58] sm:$0xff] 0.0
          %317 = vst [vmem:[#allocation2 + $0x60] sm:$0xff] 0.0
          %318 = vst [vmem:[#allocation2 + $0x68] sm:$0xff] 0.0
          %319 = vst [vmem:[#allocation2 + $0x70] sm:$0xff] 0.0
          %320 = vst [vmem:[#allocation2 + $0x78] sm:$0xff] 0.0
        $region56: #{tpu_custom_call.1} parent=35 // pred_fallthru
          _
        %s321 = smul.u32 %s27, 128
        %s322 = scalar_lea.vmem [#allocation6], %s321
        %v323 = vld [vmem:[%s322] sm:$0xff]
        %v324 = vld [vmem:[%s322 + $0x8] sm:$0xff]
        %v325 = vld [vmem:[%s322 + $0x10] sm:$0xff]
        %v326 = vld [vmem:[%s322 + $0x18] sm:$0xff]
        %v327 = vld [vmem:[%s322 + $0x20] sm:$0xff]
        %v328 = vld [vmem:[%s322 + $0x28] sm:$0xff]
        %v329 = vld [vmem:[%s322 + $0x30] sm:$0xff]
        %v330 = vld [vmem:[%s322 + $0x38] sm:$0xff]
        %v331 = vld [vmem:[%s322 + $0x40] sm:$0xff]
        %v332 = vld [vmem:[%s322 + $0x48] sm:$0xff]
        %v333 = vld [vmem:[%s322 + $0x50] sm:$0xff]
        %v334 = vld [vmem:[%s322 + $0x58] sm:$0xff]
        %v335 = vld [vmem:[%s322 + $0x60] sm:$0xff]
        %v336 = vld [vmem:[%s322 + $0x68] sm:$0xff]
        %v337 = vld [vmem:[%s322 + $0x70] sm:$0xff]
        %v338 = vld [vmem:[%s322 + $0x78] sm:$0xff]
        %v339 = vld [vmem:[#allocation2] sm:$0xff]
        %v340 = vld [vmem:[#allocation2 + $0x8] sm:$0xff]
        %v341 = vld [vmem:[#allocation2 + $0x10] sm:$0xff]
        %v342 = vld [vmem:[#allocation2 + $0x18] sm:$0xff]
        %v343 = vld [vmem:[#allocation2 + $0x20] sm:$0xff]
        %v344 = vld [vmem:[#allocation2 + $0x28] sm:$0xff]
        %v345 = vld [vmem:[#allocation2 + $0x30] sm:$0xff]
        %v346 = vld [vmem:[#allocation2 + $0x38] sm:$0xff]
        %v347 = vld [vmem:[#allocation2 + $0x40] sm:$0xff]
        %v348 = vld [vmem:[#allocation2 + $0x48] sm:$0xff]
        %v349 = vld [vmem:[#allocation2 + $0x50] sm:$0xff]
        %v350 = vld [vmem:[#allocation2 + $0x58] sm:$0xff]
        %v351 = vld [vmem:[#allocation2 + $0x60] sm:$0xff]
        %v352 = vld [vmem:[#allocation2 + $0x68] sm:$0xff]
        %v353 = vld [vmem:[#allocation2 + $0x70] sm:$0xff]
        %v354 = vld [vmem:[#allocation2 + $0x78] sm:$0xff]
        %v355 = vld [vmem:[%s251] sm:$0xff]
        %v356 = vld [vmem:[%s251 + $0x8] sm:$0xff]
        %v357 = vld [vmem:[%s251 + $0x10] sm:$0xff]
        %v358 = vld [vmem:[%s251 + $0x18] sm:$0xff]
        %v359 = vld [vmem:[%s251 + $0x20] sm:$0xff]
        %v360 = vld [vmem:[%s251 + $0x28] sm:$0xff]
        %v361 = vld [vmem:[%s251 + $0x30] sm:$0xff]
        %v362 = vld [vmem:[%s251 + $0x38] sm:$0xff]
        %v363 = vld [vmem:[%s251 + $0x40] sm:$0xff]
        %v364 = vld [vmem:[%s251 + $0x48] sm:$0xff]
        %v365 = vld [vmem:[%s251 + $0x50] sm:$0xff]
        %v366 = vld [vmem:[%s251 + $0x58] sm:$0xff]
        %v367 = vld [vmem:[%s251 + $0x60] sm:$0xff]
        %v368 = vld [vmem:[%s251 + $0x68] sm:$0xff]
        %v369 = vld [vmem:[%s251 + $0x70] sm:$0xff]
        %v370 = vld [vmem:[%s251 + $0x78] sm:$0xff]
        %371 = vmatprep.subr.mxu0 0.0
        %372 = vmatpush1.msra.mxu0 %v338
        %373 = vmatprep.subr.mxu0 0.0
        %374 = vmatpush1.msra.mxu0 %v337
        %375 = vmatprep.subr.mxu0 0.0
        %376 = vmatpush1.msra.mxu0 %v336
        %377 = vmatprep.subr.mxu0 0.0
        %378 = vmatpush1.msra.mxu0 %v335
        %379 = vmatprep.subr.mxu0 0.0
        %380 = vmatpush1.msra.mxu0 %v334
        %381 = vmatprep.subr.mxu0 0.0
        %382 = vmatpush1.msra.mxu0 %v333
        %383 = vmatprep.subr.mxu0 0.0
        %384 = vmatpush1.msra.mxu0 %v332
        %385 = vmatprep.subr.mxu0 0.0
        %386 = vmatpush1.msra.mxu0 %v331
        %387 = vmatprep.subr.mxu0 0.0
        %388 = vmatpush1.msra.mxu0 %v330
        %389 = vmatprep.subr.mxu0 0.0
        %390 = vmatpush1.msra.mxu0 %v329
        %391 = vmatprep.subr.mxu0 0.0
        %392 = vmatpush1.msra.mxu0 %v328
        %393 = vmatprep.subr.mxu0 0.0
        %394 = vmatpush1.msra.mxu0 %v327
        %395 = vmatprep.subr.mxu0 0.0
        %396 = vmatpush1.msra.mxu0 %v326
        %397 = vmatprep.subr.mxu0 0.0
        %398 = vmatpush1.msra.mxu0 %v325
        %399 = vmatprep.subr.mxu0 0.0
        %400 = vmatpush1.msra.mxu0 %v324
        %401 = vmatprep.subr.mxu0 0.0
        %402 = vmatpush1.msra.mxu0 %v323
        %403 = vmatprep.subr.mxu0 0.0
        %404 = vmatpush2.msra.mxu0 0.0
        %405 = vmatprep.subr.mxu0 0.0
        %406 = vmatpush2.msra.mxu0 0.0
        %407 = vmatprep.subr.mxu0 0.0
        %408 = vmatpush2.msra.mxu0 0.0
        %409 = vmatprep.subr.mxu0 0.0
        %410 = vmatpush2.msra.mxu0 0.0
        %411 = vmatprep.subr.mxu0 0.0
        %412 = vmatpush2.msra.mxu0 0.0
        %413 = vmatprep.subr.mxu0 0.0
        %414 = vmatpush2.msra.mxu0 0.0
        %415 = vmatprep.subr.mxu0 0.0
        %416 = vmatpush2.msra.mxu0 0.0
        %417 = vmatprep.subr.mxu0 0.0
        %418 = vmatpush2.msra.mxu0 0.0
        %419 = vmatprep.subr.mxu0 0.0
        %420 = vmatpush2.msra.mxu0 0.0
        %421 = vmatprep.subr.mxu0 0.0
        %422 = vmatpush2.msra.mxu0 0.0
        %423 = vmatprep.subr.mxu0 0.0
        %424 = vmatpush2.msra.mxu0 0.0
        %425 = vmatprep.subr.mxu0 0.0
        %426 = vmatpush2.msra.mxu0 0.0
        %427 = vmatprep.subr.mxu0 0.0
        %428 = vmatpush2.msra.mxu0 0.0
        %429 = vmatprep.subr.mxu0 0.0
        %430 = vmatpush2.msra.mxu0 0.0
        %431 = vmatprep.subr.mxu0 0.0
        %432 = vmatpush2.msra.mxu0 0.0
        %433 = vmatprep.subr.mxu0 0.0
        %434 = vmatpush2.msra.mxu0 0.0
        %435 = vmatprep.mubr.f32.mxu0 0.0
        %436 = vmatmul.mubr.f32.gmra.mxu0 %v355
        %v437 = vpop.f32.mrf.mxu0
        %v438 = vadd.f32 0.0, %v437
        %v439 = vpop.f32.mrf.mxu0
        %440 = vmatprep.mubr.f32.mxu0 0.0
        %441 = vmatmul.mubr.f32.gmra.mxu0 %v356
        %v442 = vpop.f32.mrf.mxu0
        %v443 = vadd.f32 0.0, %v442
        %v444 = vpop.f32.mrf.mxu0
        %445 = vmatprep.mubr.f32.mxu0 0.0
        %446 = vmatmul.mubr.f32.gmra.mxu0 %v357
        %v447 = vpop.f32.mrf.mxu0
        %v448 = vadd.f32 0.0, %v447
        %v449 = vpop.f32.mrf.mxu0
        %450 = vmatprep.mubr.f32.mxu0 0.0
        %451 = vmatmul.mubr.f32.gmra.mxu0 %v358
        %v452 = vpop.f32.mrf.mxu0
        %v453 = vadd.f32 0.0, %v452
        %v454 = vpop.f32.mrf.mxu0
        %455 = vmatprep.mubr.f32.mxu0 0.0
        %456 = vmatmul.mubr.f32.gmra.mxu0 %v359
        %v457 = vpop.f32.mrf.mxu0
        %v458 = vadd.f32 0.0, %v457
        %v459 = vpop.f32.mrf.mxu0
        %460 = vmatprep.mubr.f32.mxu0 0.0
        %461 = vmatmul.mubr.f32.gmra.mxu0 %v360
        %v462 = vpop.f32.mrf.mxu0
        %v463 = vadd.f32 0.0, %v462
        %v464 = vpop.f32.mrf.mxu0
        %465 = vmatprep.mubr.f32.mxu0 0.0
        %466 = vmatmul.mubr.f32.gmra.mxu0 %v361
        %v467 = vpop.f32.mrf.mxu0
        %v468 = vadd.f32 0.0, %v467
        %v469 = vpop.f32.mrf.mxu0
        %470 = vmatprep.mubr.f32.mxu0 0.0
        %471 = vmatmul.mubr.f32.gmra.mxu0 %v362
        %v472 = vpop.f32.mrf.mxu0
        %v473 = vadd.f32 0.0, %v472
        %v474 = vpop.f32.mrf.mxu0
        %475 = vmatprep.mubr.f32.mxu0 0.0
        %476 = vmatmul.mubr.f32.gmra.mxu0 %v363
        %v477 = vpop.f32.mrf.mxu0
        %v478 = vadd.f32 0.0, %v477
        %v479 = vpop.f32.mrf.mxu0
        %480 = vmatprep.mubr.f32.mxu0 0.0
        %481 = vmatmul.mubr.f32.gmra.mxu0 %v364
        %v482 = vpop.f32.mrf.mxu0
        %v483 = vadd.f32 0.0, %v482
        %v484 = vpop.f32.mrf.mxu0
        %485 = vmatprep.mubr.f32.mxu0 0.0
        %486 = vmatmul.mubr.f32.gmra.mxu0 %v365
        %v487 = vpop.f32.mrf.mxu0
        %v488 = vadd.f32 0.0, %v487
        %v489 = vpop.f32.mrf.mxu0
        %490 = vmatprep.mubr.f32.mxu0 0.0
        %491 = vmatmul.mubr.f32.gmra.mxu0 %v366
        %v492 = vpop.f32.mrf.mxu0
        %v493 = vadd.f32 0.0, %v492
        %v494 = vpop.f32.mrf.mxu0
        %495 = vmatprep.mubr.f32.mxu0 0.0
        %496 = vmatmul.mubr.f32.gmra.mxu0 %v367
        %v497 = vpop.f32.mrf.mxu0
        %v498 = vadd.f32 0.0, %v497
        %v499 = vpop.f32.mrf.mxu0
        %500 = vmatprep.mubr.f32.mxu0 0.0
        %501 = vmatmul.mubr.f32.gmra.mxu0 %v368
        %v502 = vpop.f32.mrf.mxu0
        %v503 = vadd.f32 0.0, %v502
        %v504 = vpop.f32.mrf.mxu0
        %505 = vmatprep.mubr.f32.mxu0 0.0
        %506 = vmatmul.mubr.f32.gmra.mxu0 %v369
        %v507 = vpop.f32.mrf.mxu0
        %v508 = vadd.f32 0.0, %v507
        %v509 = vpop.f32.mrf.mxu0
        %510 = vmatprep.mubr.f32.mxu0 0.0
        %511 = vmatmul.mubr.f32.gmra.mxu0 %v370
        %v512 = vpop.f32.mrf.mxu0
        %v513 = vadd.f32 0.0, %v512
        %v514 = vpop.f32.mrf.mxu0
        %515 = vdwg.mxu0
        %v516 = vadd.f32 %v339, %v438
        %v517 = vadd.f32 %v340, %v443
        %v518 = vadd.f32 %v341, %v448
        %v519 = vadd.f32 %v342, %v453
        %v520 = vadd.f32 %v343, %v458
        %v521 = vadd.f32 %v344, %v463
        %v522 = vadd.f32 %v345, %v468
        %v523 = vadd.f32 %v346, %v473
        %v524 = vadd.f32 %v347, %v478
        %v525 = vadd.f32 %v348, %v483
        %v526 = vadd.f32 %v349, %v488
        %v527 = vadd.f32 %v350, %v493
        %v528 = vadd.f32 %v351, %v498
        %v529 = vadd.f32 %v352, %v503
        %v530 = vadd.f32 %v353, %v508
        %v531 = vadd.f32 %v354, %v513
        %532 = vst [vmem:[#allocation2] sm:$0xff] %v516
        %533 = vst [vmem:[#allocation2 + $0x8] sm:$0xff] %v517
        %534 = vst [vmem:[#allocation2 + $0x10] sm:$0xff] %v518
        %535 = vst [vmem:[#allocation2 + $0x18] sm:$0xff] %v519
        %536 = vst [vmem:[#allocation2 + $0x20] sm:$0xff] %v520
        %537 = vst [vmem:[#allocation2 + $0x28] sm:$0xff] %v521
        %538 = vst [vmem:[#allocation2 + $0x30] sm:$0xff] %v522
        %539 = vst [vmem:[#allocation2 + $0x38] sm:$0xff] %v523
        %540 = vst [vmem:[#allocation2 + $0x40] sm:$0xff] %v524
        %541 = vst [vmem:[#allocation2 + $0x48] sm:$0xff] %v525
        %542 = vst [vmem:[#allocation2 + $0x50] sm:$0xff] %v526
        %543 = vst [vmem:[#allocation2 + $0x58] sm:$0xff] %v527
        %544 = vst [vmem:[#allocation2 + $0x60] sm:$0xff] %v528
        %545 = vst [vmem:[#allocation2 + $0x68] sm:$0xff] %v529
        %546 = vst [vmem:[#allocation2 + $0x70] sm:$0xff] %v530
        %547 = vst [vmem:[#allocation2 + $0x78] sm:$0xff] %v531
        %p548 = scmp.eq.s32.totalorder %s27, 1
        // Predicated region
        $region57: #{tpu_custom_call.1} parent=35 // pred_check
          %p549 = pneg %p548
        $region58: #{tpu_custom_call.1} parent=35 // pred_check_branch
          %551 = sbr.rel (%p549) target = $region60
        $region59: #{tpu_custom_call.1} parent=35 // pred_region
          %v552 = vld [vmem:[#allocation2] sm:$0xff]
          %v553 = vld [vmem:[#allocation2 + $0x8] sm:$0xff]
          %v554 = vld [vmem:[#allocation2 + $0x10] sm:$0xff]
          %v555 = vld [vmem:[#allocation2 + $0x18] sm:$0xff]
          %v556 = vld [vmem:[#allocation2 + $0x20] sm:$0xff]
          %v557 = vld [vmem:[#allocation2 + $0x28] sm:$0xff]
          %v558 = vld [vmem:[#allocation2 + $0x30] sm:$0xff]
          %v559 = vld [vmem:[#allocation2 + $0x38] sm:$0xff]
          %v560 = vld [vmem:[#allocation2 + $0x40] sm:$0xff]
          %v561 = vld [vmem:[#allocation2 + $0x48] sm:$0xff]
          %v562 = vld [vmem:[#allocation2 + $0x50] sm:$0xff]
          %v563 = vld [vmem:[#allocation2 + $0x58] sm:$0xff]
          %v564 = vld [vmem:[#allocation2 + $0x60] sm:$0xff]
          %v565 = vld [vmem:[#allocation2 + $0x68] sm:$0xff]
          %v566 = vld [vmem:[#allocation2 + $0x70] sm:$0xff]
          %v567 = vld [vmem:[#allocation2 + $0x78] sm:$0xff]
          %v568 = vmul.f32 %v552, 0.9
          %v569 = vmul.f32 %v553, 0.9
          %v570 = vmul.f32 %v554, 0.9
          %v571 = vmul.f32 %v555, 0.9
          %v572 = vmul.f32 %v556, 0.9
          %v573 = vmul.f32 %v557, 0.9
          %v574 = vmul.f32 %v558, 0.9
          %v575 = vmul.f32 %v559, 0.9
          %v576 = vmul.f32 %v560, 0.9
          %v577 = vmul.f32 %v561, 0.9
          %v578 = vmul.f32 %v562, 0.9
          %v579 = vmul.f32 %v563, 0.9
          %v580 = vmul.f32 %v564, 0.9
          %v581 = vmul.f32 %v565, 0.9
          %v582 = vmul.f32 %v566, 0.9
          %v583 = vmul.f32 %v567, 0.9
          %v584 = vld [vmem:[%s264] sm:$0xff]
          %v585 = vld [vmem:[%s264 + $0x8] sm:$0xff]
          %v586 = vld [vmem:[%s264 + $0x10] sm:$0xff]
          %v587 = vld [vmem:[%s264 + $0x18] sm:$0xff]
          %v588 = vld [vmem:[%s264 + $0x20] sm:$0xff]
          %v589 = vld [vmem:[%s264 + $0x28] sm:$0xff]
          %v590 = vld [vmem:[%s264 + $0x30] sm:$0xff]
          %v591 = vld [vmem:[%s264 + $0x38] sm:$0xff]
          %v592 = vld [vmem:[%s264 + $0x40] sm:$0xff]
          %v593 = vld [vmem:[%s264 + $0x48] sm:$0xff]
          %v594 = vld [vmem:[%s264 + $0x50] sm:$0xff]
          %v595 = vld [vmem:[%s264 + $0x58] sm:$0xff]
          %v596 = vld [vmem:[%s264 + $0x60] sm:$0xff]
          %v597 = vld [vmem:[%s264 + $0x68] sm:$0xff]
          %v598 = vld [vmem:[%s264 + $0x70] sm:$0xff]
          %v599 = vld [vmem:[%s264 + $0x78] sm:$0xff]
          %v600 = vmul.f32 %v584, 0.1
          %v601 = vmul.f32 %v585, 0.1
          %v602 = vmul.f32 %v586, 0.1
          %v603 = vmul.f32 %v587, 0.1
          %v604 = vmul.f32 %v588, 0.1
          %v605 = vmul.f32 %v589, 0.1
          %v606 = vmul.f32 %v590, 0.1
          %v607 = vmul.f32 %v591, 0.1
          %v608 = vmul.f32 %v592, 0.1
          %v609 = vmul.f32 %v593, 0.1
          %v610 = vmul.f32 %v594, 0.1
          %v611 = vmul.f32 %v595, 0.1
          %v612 = vmul.f32 %v596, 0.1
          %v613 = vmul.f32 %v597, 0.1
          %v614 = vmul.f32 %v598, 0.1
          %v615 = vmul.f32 %v599, 0.1
          %v616 = vadd.f32 %v568, %v600
          %v617 = vadd.f32 %v569, %v601
          %v618 = vadd.f32 %v570, %v602
          %v619 = vadd.f32 %v571, %v603
          %v620 = vadd.f32 %v572, %v604
          %v621 = vadd.f32 %v573, %v605
          %v622 = vadd.f32 %v574, %v606
          %v623 = vadd.f32 %v575, %v607
          %v624 = vadd.f32 %v576, %v608
          %v625 = vadd.f32 %v577, %v609
          %v626 = vadd.f32 %v578, %v610
          %v627 = vadd.f32 %v579, %v611
          %v628 = vadd.f32 %v580, %v612
          %v629 = vadd.f32 %v581, %v613
          %v630 = vadd.f32 %v582, %v614
          %v631 = vadd.f32 %v583, %v615
          %v632 = vld [vmem:[#allocation9] sm:$0xff]
          %v633 = vld [vmem:[#allocation9 + $0x8] sm:$0xff]
          %v634 = vld [vmem:[#allocation9 + $0x10] sm:$0xff]
          %v635 = vld [vmem:[#allocation9 + $0x18] sm:$0xff]
          %v636 = vld [vmem:[#allocation9 + $0x20] sm:$0xff]
          %v637 = vld [vmem:[#allocation9 + $0x28] sm:$0xff]
          %v638 = vld [vmem:[#allocation9 + $0x30] sm:$0xff]
          %v639 = vld [vmem:[#allocation9 + $0x38] sm:$0xff]
          %v640 = vld [vmem:[#allocation9 + $0x40] sm:$0xff]
          %v641 = vld [vmem:[#allocation9 + $0x48] sm:$0xff]
          %v642 = vld [vmem:[#allocation9 + $0x50] sm:$0xff]
          %v643 = vld [vmem:[#allocation9 + $0x58] sm:$0xff]
          %v644 = vld [vmem:[#allocation9 + $0x60] sm:$0xff]
          %v645 = vld [vmem:[#allocation9 + $0x68] sm:$0xff]
          %v646 = vld [vmem:[#allocation9 + $0x70] sm:$0xff]
          %v647 = vld [vmem:[#allocation9 + $0x78] sm:$0xff]
          %s648 = smul.u32 %s26, 128
          %s649 = scalar_lea.vmem [#allocation6], %s648
          %v650 = vld [vmem:[%s649] sm:$0xff]
          %v651 = vld [vmem:[%s649 + $0x8] sm:$0xff]
          %v652 = vld [vmem:[%s649 + $0x10] sm:$0xff]
          %v653 = vld [vmem:[%s649 + $0x18] sm:$0xff]
          %v654 = vld [vmem:[%s649 + $0x20] sm:$0xff]
          %v655 = vld [vmem:[%s649 + $0x28] sm:$0xff]
          %v656 = vld [vmem:[%s649 + $0x30] sm:$0xff]
          %v657 = vld [vmem:[%s649 + $0x38] sm:$0xff]
          %v658 = vld [vmem:[%s649 + $0x40] sm:$0xff]
          %v659 = vld [vmem:[%s649 + $0x48] sm:$0xff]
          %v660 = vld [vmem:[%s649 + $0x50] sm:$0xff]
          %v661 = vld [vmem:[%s649 + $0x58] sm:$0xff]
          %v662 = vld [vmem:[%s649 + $0x60] sm:$0xff]
          %v663 = vld [vmem:[%s649 + $0x68] sm:$0xff]
          %v664 = vld [vmem:[%s649 + $0x70] sm:$0xff]
          %v665 = vld [vmem:[%s649 + $0x78] sm:$0xff]
          %666 = vmatprep.subr.mxu0 0.0
          %667 = vmatpush1.msra.mxu0 %v647
          %668 = vmatprep.subr.mxu0 0.0
          %669 = vmatpush1.msra.mxu0 %v646
          %670 = vmatprep.subr.mxu0 0.0
          %671 = vmatpush1.msra.mxu0 %v645
          %672 = vmatprep.subr.mxu0 0.0
          %673 = vmatpush1.msra.mxu0 %v644
          %674 = vmatprep.subr.mxu0 0.0
          %675 = vmatpush1.msra.mxu0 %v643
          %676 = vmatprep.subr.mxu0 0.0
          %677 = vmatpush1.msra.mxu0 %v642
          %678 = vmatprep.subr.mxu0 0.0
          %679 = vmatpush1.msra.mxu0 %v641
          %680 = vmatprep.subr.mxu0 0.0
          %681 = vmatpush1.msra.mxu0 %v640
          %682 = vmatprep.subr.mxu0 0.0
          %683 = vmatpush1.msra.mxu0 %v639
          %684 = vmatprep.subr.mxu0 0.0
          %685 = vmatpush1.msra.mxu0 %v638
          %686 = vmatprep.subr.mxu0 0.0
          %687 = vmatpush1.msra.mxu0 %v637
          %688 = vmatprep.subr.mxu0 0.0
          %689 = vmatpush1.msra.mxu0 %v636
          %690 = vmatprep.subr.mxu0 0.0
          %691 = vmatpush1.msra.mxu0 %v635
          %692 = vmatprep.subr.mxu0 0.0
          %693 = vmatpush1.msra.mxu0 %v634
          %694 = vmatprep.subr.mxu0 0.0
          %695 = vmatpush1.msra.mxu0 %v633
          %696 = vmatprep.subr.mxu0 0.0
          %697 = vmatpush1.msra.mxu0 %v632
          %698 = vmatprep.subr.mxu0 0.0
          %699 = vmatpush2.msra.mxu0 0.0
          %700 = vmatprep.subr.mxu0 0.0
          %701 = vmatpush2.msra.mxu0 0.0
          %702 = vmatprep.subr.mxu0 0.0
          %703 = vmatpush2.msra.mxu0 0.0
          %704 = vmatprep.subr.mxu0 0.0
          %705 = vmatpush2.msra.mxu0 0.0
          %706 = vmatprep.subr.mxu0 0.0
          %707 = vmatpush2.msra.mxu0 0.0
          %708 = vmatprep.subr.mxu0 0.0
          %709 = vmatpush2.msra.mxu0 0.0
          %710 = vmatprep.subr.mxu0 0.0
          %711 = vmatpush2.msra.mxu0 0.0
          %712 = vmatprep.subr.mxu0 0.0
          %713 = vmatpush2.msra.mxu0 0.0
          %714 = vmatprep.subr.mxu0 0.0
          %715 = vmatpush2.msra.mxu0 0.0
          %716 = vmatprep.subr.mxu0 0.0
          %717 = vmatpush2.msra.mxu0 0.0
          %718 = vmatprep.subr.mxu0 0.0
          %719 = vmatpush2.msra.mxu0 0.0
          %720 = vmatprep.subr.mxu0 0.0
          %721 = vmatpush2.msra.mxu0 0.0
          %722 = vmatprep.subr.mxu0 0.0
          %723 = vmatpush2.msra.mxu0 0.0
          %724 = vmatprep.subr.mxu0 0.0
          %725 = vmatpush2.msra.mxu0 0.0
          %726 = vmatprep.subr.mxu0 0.0
          %727 = vmatpush2.msra.mxu0 0.0
          %728 = vmatprep.subr.mxu0 0.0
          %729 = vmatpush2.msra.mxu0 0.0
          %730 = vmatprep.mubr.f32.mxu0 0.0
          %731 = vmatmul.mubr.f32.gmra.mxu0 %v616
          %v732 = vpop.f32.mrf.mxu0
          %v733 = vadd.f32 %v650, %v732
          %v734 = vpop.f32.mrf.mxu0
          %735 = vmatprep.mubr.f32.mxu0 0.0
          %736 = vmatmul.mubr.f32.gmra.mxu0 %v617
          %v737 = vpop.f32.mrf.mxu0
          %v738 = vadd.f32 %v651, %v737
          %v739 = vpop.f32.mrf.mxu0
          %740 = vmatprep.mubr.f32.mxu0 0.0
          %741 = vmatmul.mubr.f32.gmra.mxu0 %v618
          %v742 = vpop.f32.mrf.mxu0
          %v743 = vadd.f32 %v652, %v742
          %v744 = vpop.f32.mrf.mxu0
          %745 = vmatprep.mubr.f32.mxu0 0.0
          %746 = vmatmul.mubr.f32.gmra.mxu0 %v619
          %v747 = vpop.f32.mrf.mxu0
          %v748 = vadd.f32 %v653, %v747
          %v749 = vpop.f32.mrf.mxu0
          %750 = vmatprep.mubr.f32.mxu0 0.0
          %751 = vmatmul.mubr.f32.gmra.mxu0 %v620
          %v752 = vpop.f32.mrf.mxu0
          %v753 = vadd.f32 %v654, %v752
          %v754 = vpop.f32.mrf.mxu0
          %755 = vmatprep.mubr.f32.mxu0 0.0
          %756 = vmatmul.mubr.f32.gmra.mxu0 %v621
          %v757 = vpop.f32.mrf.mxu0
          %v758 = vadd.f32 %v655, %v757
          %v759 = vpop.f32.mrf.mxu0
          %760 = vmatprep.mubr.f32.mxu0 0.0
          %761 = vmatmul.mubr.f32.gmra.mxu0 %v622
          %v762 = vpop.f32.mrf.mxu0
          %v763 = vadd.f32 %v656, %v762
          %v764 = vpop.f32.mrf.mxu0
          %765 = vmatprep.mubr.f32.mxu0 0.0
          %766 = vmatmul.mubr.f32.gmra.mxu0 %v623
          %v767 = vpop.f32.mrf.mxu0
          %v768 = vadd.f32 %v657, %v767
          %v769 = vpop.f32.mrf.mxu0
          %770 = vmatprep.mubr.f32.mxu0 0.0
          %771 = vmatmul.mubr.f32.gmra.mxu0 %v624
          %v772 = vpop.f32.mrf.mxu0
          %v773 = vadd.f32 %v658, %v772
          %v774 = vpop.f32.mrf.mxu0
          %775 = vmatprep.mubr.f32.mxu0 0.0
          %776 = vmatmul.mubr.f32.gmra.mxu0 %v625
          %v777 = vpop.f32.mrf.mxu0
          %v778 = vadd.f32 %v659, %v777
          %v779 = vpop.f32.mrf.mxu0
          %780 = vmatprep.mubr.f32.mxu0 0.0
          %781 = vmatmul.mubr.f32.gmra.mxu0 %v626
          %v782 = vpop.f32.mrf.mxu0
          %v783 = vadd.f32 %v660, %v782
          %v784 = vpop.f32.mrf.mxu0
          %785 = vmatprep.mubr.f32.mxu0 0.0
          %786 = vmatmul.mubr.f32.gmra.mxu0 %v627
          %v787 = vpop.f32.mrf.mxu0
          %v788 = vadd.f32 %v661, %v787
          %v789 = vpop.f32.mrf.mxu0
          %790 = vmatprep.mubr.f32.mxu0 0.0
          %791 = vmatmul.mubr.f32.gmra.mxu0 %v628
          %v792 = vpop.f32.mrf.mxu0
          %v793 = vadd.f32 %v662, %v792
          %v794 = vpop.f32.mrf.mxu0
          %795 = vmatprep.mubr.f32.mxu0 0.0
          %796 = vmatmul.mubr.f32.gmra.mxu0 %v629
          %v797 = vpop.f32.mrf.mxu0
          %v798 = vadd.f32 %v663, %v797
          %v799 = vpop.f32.mrf.mxu0
          %800 = vmatprep.mubr.f32.mxu0 0.0
          %801 = vmatmul.mubr.f32.gmra.mxu0 %v630
          %v802 = vpop.f32.mrf.mxu0
          %v803 = vadd.f32 %v664, %v802
          %v804 = vpop.f32.mrf.mxu0
          %805 = vmatprep.mubr.f32.mxu0 0.0
          %806 = vmatmul.mubr.f32.gmra.mxu0 %v631
          %v807 = vpop.f32.mrf.mxu0
          %v808 = vadd.f32 %v665, %v807
          %v809 = vpop.f32.mrf.mxu0
          %810 = vdwg.mxu0
          %811 = vst [vmem:[%s297] sm:$0xff] %v733
          %812 = vst [vmem:[%s297 + $0x8] sm:$0xff] %v738
          %813 = vst [vmem:[%s297 + $0x10] sm:$0xff] %v743
          %814 = vst [vmem:[%s297 + $0x18] sm:$0xff] %v748
          %815 = vst [vmem:[%s297 + $0x20] sm:$0xff] %v753
          %816 = vst [vmem:[%s297 + $0x28] sm:$0xff] %v758
          %817 = vst [vmem:[%s297 + $0x30] sm:$0xff] %v763
          %818 = vst [vmem:[%s297 + $0x38] sm:$0xff] %v768
          %819 = vst [vmem:[%s297 + $0x40] sm:$0xff] %v773
          %820 = vst [vmem:[%s297 + $0x48] sm:$0xff] %v778
          %821 = vst [vmem:[%s297 + $0x50] sm:$0xff] %v783
          %822 = vst [vmem:[%s297 + $0x58] sm:$0xff] %v788
          %823 = vst [vmem:[%s297 + $0x60] sm:$0xff] %v793
          %824 = vst [vmem:[%s297 + $0x68] sm:$0xff] %v798
          %825 = vst [vmem:[%s297 + $0x70] sm:$0xff] %v803
          %826 = vst [vmem:[%s297 + $0x78] sm:$0xff] %v808
        $region60: #{tpu_custom_call.1} parent=35 // pred_fallthru
          _
        %s827 = sand.u32 %s138, 1
        %s828 = scalar_lea.sflag [#allocation5], %s827
        %s829 = sand.u32 %s138, 1
        %s830 = smul.addr %s829, 128
        %s831 = scalar_lea.vmem [#allocation10], %s830
        // Predicated region
        $region61: #{tpu_custom_call.1} parent=35 // pred_check
          %p832 = pneg %p148
        $region62: #{tpu_custom_call.1} parent=35 // pred_check_branch
          %834 = sbr.rel (%p832) target = $region64
        $region63: #{tpu_custom_call.1} parent=35 // pred_region
          %s835 = smul.u32 16, %s26
          %s837 = ssub.s32 2048, 2048
          %838 = vsyncadd %s828, %s837
          %s839 = smul.addr %s835, 128
          %s840 = scalar_lea.hbm %s4, %s839
          %s841 = sshll.u32 %s831, 4
          %s842 = int_to_ptr.vmem [resolvable:$true] %s841
          %847 = dma.vmem_to_hbm [thread:$0]  %s842, 2048, %s840, %s828, 128, 128, 8
        $region64: #{tpu_custom_call.1} parent=35 // pred_fallthru
          _
      $region36: #{tpu_custom_call.1} parent=5 // pred_fallthru
        _
      %p848 = scmp.le.s32.totalorder 2, %s17
      // Predicated region
      $region65: #{tpu_custom_call.1} parent=5 // pred_check
        %p849 = pneg %p848
      $region66: #{tpu_custom_call.1} parent=5 // pred_check_branch
        %851 = sbr.rel (%p849) target = $region68
      $region67: #{tpu_custom_call.1} parent=5 // pred_region
        %s852 = ssub.s32 %s17, 2
        // Predicated region
        $region69: #{tpu_custom_call.1} parent=67 // pred_check
          %p853 = pneg %p154
        $region70: #{tpu_custom_call.1} parent=67 // pred_check_branch
          %855 = sbr.rel (%p853) target = $region72
        $region71: #{tpu_custom_call.1} parent=67 // pred_region
          %s856 = sand.u32 %s139, 1
          %s857 = scalar_lea.sflag [#allocation5], %s856
          %s858 = sand.u32 %s139, 1
          %s859 = smul.addr %s858, 128
          %s860 = scalar_lea.vmem [#allocation10], %s859
          %861 = dma.done %s857, 2048
        $region72: #{tpu_custom_call.1} parent=67 // pred_fallthru
          _
      $region68: #{tpu_custom_call.1} parent=5 // pred_fallthru
        _
    $region6: #{tpu_custom_call.1} parent=1 // loop_footer
      %s21 = sadd.s32 1, %s17
    $region7: #{tpu_custom_call.1} parent=1 // loop_footer_branch
      %16 = sbr.rel target = $region3
    $region8: #{tpu_custom_call.1} parent=1 // loop_exit
      _
    %862 = vsyncpa [#allocation4], 1
    %s863 = scalar_lea.sflag [#allocation4], 1
    %864 = vsyncpa %s863, 1
    %865 = vsyncpa [#allocation7], 1
    %866 = vsyncpa [#allocation5], 1
    %s867 = scalar_lea.sflag [#allocation5], 1
    %868 = vsyncpa %s867, 1

</llo_original>
